<compile_context>
chip_gen: v5e
topology: v5e:2x2
jax: 0.10.0
libtpu: 0.0.40
codegen_flags: <defaults>
</compile_context>

<pallas_src>
import jax
import jax.numpy as jnp
from jax import lax
from jax.experimental import pallas as pl
from jax.experimental.pallas import tpu as pltpu

# ---- model / problem sizes (small, consistent with the module) ----
VOCAB = 96          # number of embeddings
INPUT_SIZE = 128    # embedding dim (input_size)
SIZE = 64           # projection output dim (size)
BATCH = 2
LENGTH = 8


def _round_up(a, b):
    return ((a + b - 1) // b) * b


def embed_kernel(ids_ref, w_ref, out_ref):
    """One grid step handles TM tokens with a single MXU dot.

    ids_ref : VMEM (TM, 1) int32          -- token ids for this tile
    w_ref   : VMEM (VOCAB, SIZE_PAD) f32  -- fused, lane-padded table W = E @ mat.T
    out_ref : VMEM (TM, SIZE_PAD) f32     -- lane-dense output tile
    """
    tm = ids_ref.shape[0]
    vocab = w_ref.shape[0]

    ids = ids_ref[...]                                            # (TM, 1)
    vocab_iota = lax.broadcasted_iota(jnp.int32, (tm, vocab), 1)  # (TM, VOCAB)
    onehot = (ids == vocab_iota).astype(jnp.float32)              # OOB/pad id -> all-zero row

    # t = onehot @ W : exact row gather of the fused projection via the MXU.
    out_ref[...] = lax.dot_general(
        onehot, w_ref[...],
        dimension_numbers=(((1,), (0,)), ((), ())),
        preferred_element_type=jnp.float32,
    ).astype(out_ref.dtype)


def prepare_embed_params(emb_table, mat):
    """Parameter-only preprocessing (done once at module init, NOT per call).

    Fuses the two matmuls of the forward pass: W = E @ mat.T, and pads the
    output dim to exactly 128 lanes so kernel stores are unmasked full-lane vst.
    """
    vocab, input_size = emb_table.shape
    size, input_size2 = mat.shape
    assert input_size == input_size2
    size_pad = _round_up(max(size, 128), 128)
    w = jnp.dot(emb_table, mat.T,
                preferred_element_type=jnp.float32,
                precision=jax.lax.Precision.HIGHEST)              # (VOCAB, SIZE) f32
    w_pad = jnp.zeros((vocab, size_pad), jnp.float32).at[:, :size].set(w)
    return w_pad, size


def embed_forward(x, w_pad, size):
    """x: (B, L) int ids; w_pad: (VOCAB, SIZE_PAD) f32 fused table."""
    B, L = x.shape
    vocab, size_pad = w_pad.shape
    N = B * L

    # Tile sizing: one step while launch-bound; long 512-row tiles (=> >=2 grid
    # steps, sharded across v7x's two TensorCores via "parallel") once N grows.
    n8 = _round_up(N, 8)
    tm = n8 if n8 <= 512 else 512
    n_pad = _round_up(N, tm)
    grid_steps = n_pad // tm

    ids = x.reshape(-1).astype(jnp.int32)
    if n_pad != N:
        # Padding tokens get id == vocab (OOB) -> one-hot row all zeros -> zero output.
        ids = jnp.concatenate([ids, jnp.full((n_pad - N,), vocab, jnp.int32)])
    ids = ids.reshape(n_pad, 1)

    # The fused table W never changes across grid steps: single-buffer it when
    # there is more than one step (its index_map is constant).
    if grid_steps > 1:
        w_spec = pl.BlockSpec((vocab, size_pad), lambda i: (0, 0),
                              pipeline_mode=pl.Buffered(1))
        resident_bufs = 1
    else:
        w_spec = pl.BlockSpec((vocab, size_pad), lambda i: (0, 0))
        resident_bufs = 2

    # VMEM headroom only when the footprint is scaled up (v5e scoped default
    # is 16 MiB vs 32 MiB on v6e/v7x).
    need = (2 * tm * (size_pad * 4 + 4)              # out + ids, double-buffered
            + resident_bufs * vocab * size_pad * 4)  # resident fused table
    vmem_limit = need + (4 << 20) if need > (12 << 20) else None

    out_flat = pl.pallas_call(
        embed_kernel,
        out_shape=jax.ShapeDtypeStruct((n_pad, size_pad), jnp.float32),
        grid_spec=pltpu.PrefetchScalarGridSpec(
            num_scalar_prefetch=0,
            grid=(grid_steps,),
            in_specs=[
                pl.BlockSpec((tm, 1), lambda i: (i, 0)),   # token ids
                w_spec,                                    # fused table (resident)
            ],
            out_specs=pl.BlockSpec((tm, size_pad), lambda i: (i, 0)),
        ),
        compiler_params=pltpu.CompilerParams(
            dimension_semantics=("parallel",),
            vmem_limit_bytes=vmem_limit,
        ),
    )(ids, w_pad)

    return out_flat[:N, :size].reshape(B, L, size)


if __name__ == "__main__":
    key = jax.random.PRNGKey(0)
    k_emb, k_mat, k_ids = jax.random.split(key, 3)

    # Deterministic "reset_parameters": normal_() init for both tables.
    emb_table = jax.random.normal(k_emb, (VOCAB, INPUT_SIZE), dtype=jnp.float32)
    mat = jax.random.normal(k_mat, (SIZE, INPUT_SIZE), dtype=jnp.float32)

    x = jax.random.randint(k_ids, (BATCH, LENGTH), 0, VOCAB, dtype=jnp.int32)

    # One-time parameter prep (module init), then the forward pass.
    w_pad, size = prepare_embed_params(emb_table, mat)
    out = jax.block_until_ready(embed_forward(x, w_pad, size))

    # Pure-JAX f32 reference for the same forward pass (gather then mm).
    # Tolerance covers the TPU default-precision matmul used by the reference.
    e_ref = emb_table[x.reshape(-1)]
    ref = (e_ref @ mat.T).reshape(BATCH, LENGTH, SIZE)

    assert out.shape == (BATCH, LENGTH, SIZE)
    assert jnp.allclose(out, ref, rtol=2e-2, atol=5e-1), (
        float(jnp.max(jnp.abs(out - ref))))
    print("KERNEL_OK")
</pallas_src>

<mosaic_0001>
module attributes {stable_mosaic.version = 11 : i64} {
  func.func @embed_kernel(%arg0: i32, %arg1: memref<16x1xi32, #tpu.memory_space<vmem>>, %arg2: memref<96x128xf32, #tpu.memory_space<vmem>>, %arg3: memref<16x128xf32, #tpu.memory_space<vmem>>) attributes {dimension_semantics = [#tpu.dimension_semantics<parallel>], iteration_bounds = array<i64: 1>, scalar_prefetch = 0 : i64, scratch_operands = 0 : i64, tpu.core_type = #tpu.core_type<tc>, window_params = [{transform_indices = @transform_0, window_bounds = array<i64: 16, 1>}, {pipeline_mode = #tpu.pipeline_mode<synchronous>, transform_indices = @transform_1, window_bounds = array<i64: 96, 128>}, {transform_indices = @transform_2, window_bounds = array<i64: 16, 128>}]} {
    %c0 = arith.constant 0 : index
    %c0_0 = arith.constant 0 : index
    %0 = vector.load %arg1[%c0, %c0_0] : memref<16x1xi32, #tpu.memory_space<vmem>>, vector<16x1xi32>
    %1 = tpu.iota {dimensions = array<i32: 1>} : vector<16x96xi32>
    %2 = vector.broadcast %0 : vector<16x1xi32> to vector<16x96xi32>
    %3 = arith.cmpi eq, %2, %1 : vector<16x96xi32>
    %4 = arith.extui %3 : vector<16x96xi1> to vector<16x96xi32>
    %5 = arith.sitofp %4 : vector<16x96xi32> to vector<16x96xf32>
    %c0_1 = arith.constant 0 : index
    %c0_2 = arith.constant 0 : index
    %6 = vector.load %arg2[%c0_1, %c0_2] : memref<96x128xf32, #tpu.memory_space<vmem>>, vector<96x128xf32>
    %cst = arith.constant dense<0.000000e+00> : vector<16x128xf32>
    %7 = tpu.matmul %5, %6, %cst {dimension_numbers = #tpu.dot_dimension_numbers<[1], [0], [0], [1], [0, 0, 1, 1], [], []>} : vector<16x96xf32>, vector<96x128xf32>, vector<16x128xf32> -> vector<16x128xf32>
    %c0_3 = arith.constant 0 : index
    %c0_4 = arith.constant 0 : index
    %8 = vector.load %arg3[%c0_3, %c0_4] : memref<16x128xf32, #tpu.memory_space<vmem>>, vector<16x128xf32>
    tpu.vector_store %arg3[%c0_3, %c0_4], %7 {strides = array<i32>} : memref<16x128xf32, #tpu.memory_space<vmem>>, vector<16x128xf32>,
    return
  }
  func.func @transform_0(%arg0: i32) -> (i32, i32) {
    %c0_i32 = arith.constant 0 : i32
    %c0_i32_0 = arith.constant 0 : i32
    return %arg0, %c0_i32 : i32, i32
  }
  func.func @transform_1(%arg0: i32) -> (i32, i32) {
    %c0_i32 = arith.constant 0 : i32
    %c0_i32_0 = arith.constant 0 : i32
    %c0_i32_1 = arith.constant 0 : i32
    return %c0_i32, %c0_i32_0 : i32, i32
  }
  func.func @transform_2(%arg0: i32) -> (i32, i32) {
    %c0_i32 = arith.constant 0 : i32
    %c0_i32_0 = arith.constant 0 : i32
    return %arg0, %c0_i32 : i32, i32
  }
}

</mosaic_0001>

<llo_original>
// kernel: tpu_custom_call.1
$region0: #{tpu_custom_call.1}
  #allocation0 [shape = 'u32[]', space=smem, size = 0x4, offset = 0x4, fixed_abs, tag = 'smem constant byte address 0x4 - core index']
  #allocation1 [shape = 'u32[72,128]{1,0:T(1,128)}', space=vmem, size = 0x9000, scoped, tag = 'internal scratch']
  %s0 = inlined_call_operand.vmem [shape: s32[16,1], index: 0, kind: input, shape index: {}]
  %s1 = inlined_call_operand.hbm [shape: f32[96,128], index: 1, kind: input, shape index: {}]
  %s2 = inlined_call_operand.hbm [shape: f32[16,128], index: 2, kind: output, shape index: {}]
  %s3 = sld [smem:[#allocation0]]
  $region22: #{tpu_custom_call.1} parent=0
    _
  %s5 = ssub.s32 1, %s3
  %s6 = scalar_select 0, %s5, %s3
  $region1: #{tpu_custom_call.1} parent=0
    #allocation2 [shape = 'u8[49152]{0}', space=vmem, size = 0xc000, scoped, tag = 'input window, operand 1, single buffered']
    #allocation3 [shape = 's32[1]{0}', space=sflag, size = 0x4, scoped, tag = 'scoped memory for tpu_custom_call.1']
    #allocation4 [shape = 's32[1]{0}', space=sflag, size = 0x4, scoped, tag = 'scoped memory for tpu_custom_call.1']
    #allocation5 [shape = 'u8[8192]{0}', space=vmem, size = 0x2000, scoped, tag = 'output window, operand 0, single buffered']
    %7 = vsyncpa [#allocation3], 0
    %8 = vsyncpa [#allocation4], 0
    // Predicated region
    $region2: #{tpu_custom_call.1} parent=1 // pred_check
      _
    $region3: #{tpu_custom_call.1} parent=1 // pred_check_branch
      %10 = sbr.rel (0) target = $region5
    $region4: #{tpu_custom_call.1} parent=1 // pred_region
      _
    $region5: #{tpu_custom_call.1} parent=1 // pred_fallthru
      _
    // Predicated region
    $region6: #{tpu_custom_call.1} parent=1 // pred_check
      _
    $region7: #{tpu_custom_call.1} parent=1 // pred_check_branch
      %12 = sbr.rel (0) target = $region9
    $region8: #{tpu_custom_call.1} parent=1 // pred_region
      %14 = vsyncadd [#allocation3], 0
      %s15 = sshll.u32 %s1, 4
      %s16 = int_to_ptr.hbm [resolvable:$true] %s15
      %s17 = sshll.u32 [#allocation2], 4
      %s18 = int_to_ptr.vmem [resolvable:$true] %s17
      %23 = dma.hbm_to_vmem [thread:$0]  %s16, 1536, %s18, [#allocation3], 128, 128, 8
    $region9: #{tpu_custom_call.1} parent=1 // pred_fallthru
      _
    // Predicated region
    $region10: #{tpu_custom_call.1} parent=1 // pred_check
      _
    $region11: #{tpu_custom_call.1} parent=1 // pred_check_branch
      %25 = sbr.rel (0) target = $region13
    $region12: #{tpu_custom_call.1} parent=1 // pred_region
      %27 = dma.done [#allocation3], 1536
    $region13: #{tpu_custom_call.1} parent=1 // pred_fallthru
      _
    %v28 = vld [vmem:[%s0] sm:$0xff]
    %v29 = vld [vmem:[%s0 + $0x8] sm:$0xff]
    %v30 = vlaneseq
    %v31 = vand.u32 %v30, 127
    %32 = vset.pattern.permute.xlu0 0
    %33 = vperm.xlu0 %32, %v28
    %v34 = vpop.permute.xlu0 %33
    %35 = vset.pattern.permute.xlu0 0
    %36 = vperm.xlu0 %35, %v29
    %v37 = vpop.permute.xlu0 %36
    %vm38 = vcmp.eq.s32.totalorder %v34, %v31
    %vm39 = vcmp.eq.s32.totalorder %v37, %v31
    %v40 = vsel %vm38, 1, 0
    %v41 = vsel %vm39, 1, 0
    %v42 = vcvt.s32.f32 %v40
    %v43 = vcvt.s32.f32 %v41
    %v44 = vld [vmem:[#allocation2] sm:$0xff]
    %v45 = vld [vmem:[#allocation2 + $0x8] sm:$0xff]
    %v46 = vld [vmem:[#allocation2 + $0x10] sm:$0xff]
    %v47 = vld [vmem:[#allocation2 + $0x18] sm:$0xff]
    %v48 = vld [vmem:[#allocation2 + $0x20] sm:$0xff]
    %v49 = vld [vmem:[#allocation2 + $0x28] sm:$0xff]
    %v50 = vld [vmem:[#allocation2 + $0x30] sm:$0xff]
    %v51 = vld [vmem:[#allocation2 + $0x38] sm:$0xff]
    %v52 = vld [vmem:[#allocation2 + $0x40] sm:$0xff]
    %v53 = vld [vmem:[#allocation2 + $0x48] sm:$0xff]
    %v54 = vld [vmem:[#allocation2 + $0x50] sm:$0xff]
    %v55 = vld [vmem:[#allocation2 + $0x58] sm:$0xff]
    %vm56 = vcmask 785408
    %v58 = vsel %vm56, %v42, 0
    %v61 = vsel %vm56, %v43, 0
    %63 = vmatpush.msra.mxu0 0.0
    %64 = vmatpush.msra.mxu0 0.0
    %65 = vmatpush.msra.mxu0 0.0
    %66 = vmatpush.msra.mxu0 0.0
    %67 = vmatpush.msra.mxu0 %v55
    %68 = vmatpush.msra.mxu0 %v54
    %69 = vmatpush.msra.mxu0 %v53
    %70 = vmatpush.msra.mxu0 %v52
    %71 = vmatpush.msra.mxu0 %v51
    %72 = vmatpush.msra.mxu0 %v50
    %73 = vmatpush.msra.mxu0 %v49
    %74 = vmatpush.msra.mxu0 %v48
    %75 = vmatpush.msra.mxu0 %v47
    %76 = vmatpush.msra.mxu0 %v46
    %77 = vmatpush.msra.mxu0 %v45
    %78 = vmatpush.msra.mxu0 %v44
    %79 = vmatmul.f32.gmra.mxu0 %v58
    %v80 = vpop.f32.mrf.mxu0
    %v81 = vadd.f32 0.0, %v80
    %82 = vmatmul.f32.gmra.mxu0 %v61
    %v83 = vpop.f32.mrf.mxu0
    %v84 = vadd.f32 0.0, %v83
    %85 = vdwg.mxu0
    %86 = vst [vmem:[#allocation5] sm:$0xff] %v81
    %87 = vst [vmem:[#allocation5 + $0x8] sm:$0xff] %v84
    // Predicated region
    $region14: #{tpu_custom_call.1} parent=1 // pred_check
      _
    $region15: #{tpu_custom_call.1} parent=1 // pred_check_branch
      %89 = sbr.rel (0) target = $region17
    $region16: #{tpu_custom_call.1} parent=1 // pred_region
      %91 = vsyncadd [#allocation4], 0
      %s92 = sshll.u32 [#allocation5], 4
      %s93 = int_to_ptr.vmem [resolvable:$true] %s92
      %s94 = sshll.u32 %s2, 4
      %s95 = int_to_ptr.hbm [resolvable:$true] %s94
      %100 = dma.vmem_to_hbm [thread:$0]  %s93, 256, %s95, [#allocation4], 128, 128, 8
    $region17: #{tpu_custom_call.1} parent=1 // pred_fallthru
      _
    // Predicated region
    $region18: #{tpu_custom_call.1} parent=1 // pred_check
      _
    $region19: #{tpu_custom_call.1} parent=1 // pred_check_branch
      %102 = sbr.rel (0) target = $region21
    $region20: #{tpu_custom_call.1} parent=1 // pred_region
      %104 = dma.done [#allocation4], 256
    $region21: #{tpu_custom_call.1} parent=1 // pred_fallthru
      _
    %105 = vsyncpa [#allocation3], 1
    %106 = vsyncpa [#allocation4], 1

</llo_original>
